<compile_context>
chip_gen: v7x
topology: tpu7x:2x2x1
jax: 0.10.0
libtpu: 0.0.40
codegen_flags: <defaults>
</compile_context>

<pallas_src>
import functools
import math

import jax
import jax.numpy as jnp
from jax.experimental import pallas as pl
from jax.experimental.pallas import tpu as pltpu

TOL = 1e-8
LANE = 128


def _round_up(x, m):
    return ((x + m - 1) // m) * m


# ----------------------------------------------------------------------------
# Fused Pallas kernel:
#   [normalize -> Linear -> ReLU -> goodness] x L  + folded linear classifier
# ----------------------------------------------------------------------------
def _make_fused_kernel(num_layers, pn_rows, d_in_true, num_classes, ss_pad, tol=TOL):
    """Ref order: z, (w0,b0), ..., (w_{L-1},b_{L-1}), clf_w | ss_slab, cls_logits.

    Rows [0:pn_rows] are pos+neg samples (FF goodness path), rows [pn_rows:] are
    the neutral samples feeding the downstream classifier.
    """

    def kernel(*refs):
        z_ref = refs[0]
        w_refs = [refs[1 + 2 * i] for i in range(num_layers)]
        b_refs = [refs[2 + 2 * i] for i in range(num_layers)]
        clf_ref = refs[1 + 2 * num_layers]
        ss_ref = refs[2 + 2 * num_layers]    # (pn_rows, ss_pad)   f32, lane-dense
        cls_ref = refs[3 + 2 * num_layers]   # (n_neu, n_cls_pad)  f32, lane-dense

        n_neu = cls_ref.shape[0]
        n_cls_pad = cls_ref.shape[1]
        hidden = w_refs[0].shape[1]

        # ---- layer 0 normalization ----
        # padded lanes of z are zero, so the row-sum equals the true-feature sum;
        # divide by the TRUE (unpadded) feature count.
        h = z_ref[...].astype(jnp.float32)
        mean_sq = jnp.sum(h * h, axis=1, keepdims=True) * (1.0 / float(d_in_true))
        inv = pl.reciprocal(jnp.sqrt(mean_sq) + tol)          # exact; EUP has slack
        zn = (h * inv).astype(jnp.bfloat16)

        ss_cols = []
        logits = jnp.zeros((n_neu, n_cls_pad), jnp.float32)   # classifier accumulator

        for idx in range(num_layers):
            d_out = w_refs[idx].shape[1]
            # nn.Linear on the MXU (weights pre-transposed to (in, out)), f32 accumulate
            a = jnp.dot(zn, w_refs[idx][...], preferred_element_type=jnp.float32)
            a = a + b_refs[idx][...]
            h = jnp.maximum(a, 0.0)                           # ReLU_full_grad.forward
            ss = jnp.sum(h * h, axis=1, keepdims=True)        # FF goodness (sum of squares)
            ss_cols.append(ss[:pn_rows, :])                   # only pos+neg rows leave kernel

            if idx < num_layers - 1:
                # next-layer input = normalize(h); REUSE ss instead of recomputing sum(h^2)
                inv = pl.reciprocal(jnp.sqrt(ss * (1.0 / float(d_out))) + tol)
                zn_f32 = h * inv
                zn = zn_f32.astype(jnp.bfloat16)

            if idx >= 1:
                # classifier features = normalized neutral-row activations of layers 1..L-1
                if idx < num_layers - 1:
                    zn_neu = zn_f32[pn_rows:, :].astype(jnp.bfloat16)
                else:
                    # last layer: only the neutral rows need normalizing
                    inv_neu = pl.reciprocal(
                        jnp.sqrt(ss[pn_rows:, :] * (1.0 / float(d_out))) + tol)
                    zn_neu = (h[pn_rows:, :] * inv_neu).astype(jnp.bfloat16)
                logits = logits + jnp.dot(
                    zn_neu, clf_ref[(idx - 1) * hidden: idx * hidden, :],
                    preferred_element_type=jnp.float32)

        # ---- one lane-dense store of all per-layer goodness values ----
        cols = list(ss_cols)
        if ss_pad > num_layers:
            cols.append(jnp.zeros((pn_rows, ss_pad - num_layers), jnp.float32))
        ss_ref[...] = jnp.concatenate(cols, axis=1)

        # "output - max(output, dim=-1, keepdim=True)": the max is over REAL classes
        # only (padded logit columns are exact zeros since padded clf columns are zero).
        row_max = jnp.max(logits[:, :num_classes], axis=-1, keepdims=True)
        cls_ref[...] = logits - row_max

    return kernel


def fused_ff_forward(z_all, weights, biases, clf_w_pad, *, pn_rows, d_in_true,
                     num_classes):
    """Single pallas_call for the whole forward pass.

    Returns (ss_slab[(pn_rows, 128)], padded_classifier_logits[(n_neu, 128)])."""
    num_layers = len(weights)
    n_total = z_all.shape[0]
    n_neu = n_total - pn_rows
    n_cls_pad = clf_w_pad.shape[1]
    ss_pad = _round_up(num_layers, LANE)

    kernel = _make_fused_kernel(num_layers, pn_rows, d_in_true, num_classes, ss_pad)

    args = [z_all]
    in_specs = [pl.BlockSpec(z_all.shape, lambda i: (0, 0))]
    for w, b in zip(weights, biases):
        args += [w, b]
        in_specs += [pl.BlockSpec(w.shape, lambda i: (0, 0)),
                     pl.BlockSpec(b.shape, lambda i: (0, 0))]
    args.append(clf_w_pad)
    in_specs.append(pl.BlockSpec(clf_w_pad.shape, lambda i: (0, 0)))

    out_shape = (jax.ShapeDtypeStruct((pn_rows, ss_pad), jnp.float32),
                 jax.ShapeDtypeStruct((n_neu, n_cls_pad), jnp.float32))
    out_specs = (pl.BlockSpec((pn_rows, ss_pad), lambda i: (0, 0)),
                 pl.BlockSpec((n_neu, n_cls_pad), lambda i: (0, 0)))

    # ---- advisory cost estimate ----
    flops = 2 * n_neu * clf_w_pad.shape[0] * num_classes
    bytes_accessed = (z_all.size * z_all.dtype.itemsize
                      + clf_w_pad.size * clf_w_pad.dtype.itemsize
                      + pn_rows * ss_pad * 4 + n_neu * n_cls_pad * 4)
    for w, b in zip(weights, biases):
        flops += 2 * n_total * w.shape[0] * w.shape[1]
        bytes_accessed += w.size * w.dtype.itemsize + b.size * b.dtype.itemsize
    transcendentals = 2 * n_total * (num_layers + 1)

    # ---- VMEM budget derived from real buffer sizes (not a copied constant) ----
    in_bytes = sum(int(a.size) * a.dtype.itemsize for a in args)
    out_bytes = pn_rows * ss_pad * 4 + n_neu * n_cls_pad * 4
    max_w = max([z_all.shape[1]] + [w.shape[1] for w in weights])
    interm_bytes = 6 * n_total * max_w * 4      # a few f32 activation tiles
    vmem_limit = min(96 * 1024 * 1024,
                     max(4 * 1024 * 1024, 2 * (in_bytes + out_bytes) + interm_bytes))

    return pl.pallas_call(
        kernel,
        grid=(1,),
        out_shape=out_shape,
        in_specs=in_specs,
        out_specs=out_specs,
        compiler_params=pltpu.CompilerParams(
            dimension_semantics=("arbitrary",),
            vmem_limit_bytes=int(vmem_limit),
        ),
        cost_estimate=pl.CostEstimate(
            flops=flops,
            transcendentals=transcendentals,
            bytes_accessed=bytes_accessed,
        ),
    )(*args)


# ----------------------------------------------------------------------------
# Model forward (losses/accuracies are tiny scalar reductions -> plain JAX)
# ----------------------------------------------------------------------------
def _bce_with_logits(logits, targets):
    # numerically stable BCEWithLogitsLoss (mean reduction)
    return jnp.mean(
        jnp.maximum(logits, 0.0) - logits * targets + jnp.log1p(jnp.exp(-jnp.abs(logits)))
    )


def ff_model_forward(weights, biases, clf_w, x, y, batch_size):
    num_layers = len(weights)
    assert num_layers >= 2, "classifier needs features from layers 1..L-1"

    # Flatten NCHW -> (batch, C*H*W), concatenate pos/neg/neutral on the batch axis
    pos = x["pos_images"].reshape(x["pos_images"].shape[0], -1).astype(jnp.float32)
    neg = x["neg_images"].reshape(x["neg_images"].shape[0], -1).astype(jnp.float32)
    neu = x["neutral_sample"].reshape(x["neutral_sample"].shape[0], -1).astype(jnp.float32)
    d_in = pos.shape[1]
    z_all = jnp.concatenate([pos, neg, neu], axis=0)

    # zero-pad the feature (lane) dim to what the (padded) layer-0 weights expect,
    # then ship as bf16 (largest per-call HBM read halved; sums stay f32 in-kernel)
    d_pad = weights[0].shape[0]
    if d_pad != d_in:
        z_all = jnp.pad(z_all, ((0, 0), (0, d_pad - d_in)))
    z_all = z_all.astype(jnp.bfloat16)

    n_pn = pos.shape[0] + neg.shape[0]          # pos+neg rows (FF path)
    # NOTE: n_pn = 2*batch is a multiple of 8 for even batch sizes -> the neutral-row
    # slice inside the kernel stays sublane-aligned (correct either way).
    num_classes = clf_w.shape[1]
    n_cls_pad = _round_up(num_classes, LANE)
    clf_w_pad = clf_w if n_cls_pad == num_classes else jnp.pad(
        clf_w, ((0, 0), (0, n_cls_pad - num_classes)))

    ss_slab, cls_pad = fused_ff_forward(
        z_all, weights, biases, clf_w_pad,
        pn_rows=n_pn, d_in_true=d_in, num_classes=num_classes)
    cls_logits = cls_pad[:, :num_classes]

    outputs = {"loss": jnp.zeros((1,), jnp.float32)}

    # ---- forward-forward losses (pos + neg rows) ----
    posneg_labels = jnp.concatenate(
        [jnp.ones((batch_size,), jnp.float32),
         jnp.zeros((n_pn - batch_size,), jnp.float32)]
    )
    for idx in range(num_layers):
        d_out = float(weights[idx].shape[1])
        logits = ss_slab[:, idx] - d_out            # sum_squares - z.shape[1]
        ff_loss = _bce_with_logits(logits, posneg_labels)
        pred = jax.nn.sigmoid(logits) > 0.5
        ff_accuracy = jnp.mean((pred == (posneg_labels > 0.5)).astype(jnp.float32))
        outputs[f"loss_layer_{idx}"] = ff_loss
        outputs[f"accuracy_layer_{idx}"] = ff_accuracy
        outputs["loss"] = outputs["loss"] + ff_loss

    # ---- downstream classification (neutral rows) ----
    labels = y["class_labels"]
    lse = jax.nn.logsumexp(cls_logits, axis=-1)
    picked = jnp.take_along_axis(cls_logits, labels[:, None], axis=-1)[:, 0]
    classification_loss = jnp.mean(lse - picked)     # CrossEntropyLoss (mean)
    # TODO(synk): utils.get_accuracy is external; implemented as top-1 accuracy.
    accuracy = jnp.mean((jnp.argmax(cls_logits, axis=-1) == labels).astype(jnp.float32))

    outputs["loss"] = outputs["loss"] + classification_loss
    outputs["accuracy"] = accuracy
    outputs["classification_loss"] = classification_loss
    return outputs


# ----------------------------------------------------------------------------
# Deterministic parameter init (mirrors FFModel._init_weights)
# ----------------------------------------------------------------------------
def init_params(key, in_dim, hidden_dim, num_layers, num_classes):
    d_pad = _round_up(in_dim, LANE)              # lane-dense padded input width
    dims = [in_dim] + [hidden_dim] * num_layers
    weights, biases = [], []
    keys = jax.random.split(key, num_layers)
    for i in range(num_layers):
        # torch: normal_(weight, mean=0, std=sqrt(weight.shape[0])) with weight (out, in)
        std = math.sqrt(float(dims[i + 1]))
        w = jax.random.normal(keys[i], (dims[i], dims[i + 1]), jnp.float32) * std
        if i == 0 and d_pad != in_dim:
            w = jnp.pad(w, ((0, d_pad - in_dim), (0, 0)))   # zero rows -> no effect
        weights.append(w.astype(jnp.bfloat16))              # bf16 weights in HBM
        biases.append(jnp.zeros((1, dims[i + 1]), jnp.float32))
    # linear_classifier weight initialized to zeros, no bias; stored (in, out)
    clf_in = hidden_dim * (num_layers - 1)
    clf_w = jnp.zeros((clf_in, num_classes), jnp.bfloat16)
    return weights, biases, clf_w


if __name__ == "__main__":
    # small config: opt.input.batch_size=4, opt.model.hidden_dim=128,
    # opt.model.num_layers=3, opt.data.num_classes=10, MNIST-like 1x28x28 inputs.
    BATCH = 4
    HIDDEN = 128
    NUM_LAYERS = 3
    NUM_CLASSES = 10
    IN_DIM = 784

    root = jax.random.PRNGKey(0)
    k_pos, k_neg, k_neu, k_lbl, k_par = jax.random.split(root, 5)

    x = {
        "pos_images": jax.random.normal(k_pos, (BATCH, 1, 28, 28), jnp.float32),
        "neg_images": jax.random.normal(k_neg, (BATCH, 1, 28, 28), jnp.float32),
        "neutral_sample": jax.random.normal(k_neu, (BATCH, 1, 28, 28), jnp.float32),
    }
    y = {"class_labels": jax.random.randint(k_lbl, (BATCH,), 0, NUM_CLASSES)}

    weights, biases, clf_w = init_params(k_par, IN_DIM, HIDDEN, NUM_LAYERS, NUM_CLASSES)

    fwd = jax.jit(functools.partial(ff_model_forward, batch_size=BATCH))
    outputs = fwd(weights, biases, clf_w, x, y)
    jax.block_until_ready(outputs["loss"])

    print("KERNEL_OK")
</pallas_src>

<mosaic_0001>
module attributes {stable_mosaic.version = 11 : i64} {
  func.func @kernel(%arg0: i32, %arg1: memref<12x896xbf16, #tpu.memory_space<vmem>>, %arg2: memref<896x128xbf16, #tpu.memory_space<vmem>>, %arg3: memref<1x128xf32, #tpu.memory_space<vmem>>, %arg4: memref<128x128xbf16, #tpu.memory_space<vmem>>, %arg5: memref<1x128xf32, #tpu.memory_space<vmem>>, %arg6: memref<128x128xbf16, #tpu.memory_space<vmem>>, %arg7: memref<1x128xf32, #tpu.memory_space<vmem>>, %arg8: memref<256x128xbf16, #tpu.memory_space<vmem>>, %arg9: memref<8x128xf32, #tpu.memory_space<vmem>>, %arg10: memref<4x128xf32, #tpu.memory_space<vmem>>) attributes {dimension_semantics = [#tpu.dimension_semantics<arbitrary>], iteration_bounds = array<i64: 1>, scalar_prefetch = 0 : i64, scratch_operands = 0 : i64, tpu.core_type = #tpu.core_type<tc>, window_params = [{pipeline_mode = #tpu.pipeline_mode<synchronous>, transform_indices = @transform_0, window_bounds = array<i64: 12, 896>}, {pipeline_mode = #tpu.pipeline_mode<synchronous>, transform_indices = @transform_1, window_bounds = array<i64: 896, 128>}, {pipeline_mode = #tpu.pipeline_mode<synchronous>, transform_indices = @transform_2, window_bounds = array<i64: 1, 128>}, {pipeline_mode = #tpu.pipeline_mode<synchronous>, transform_indices = @transform_3, window_bounds = array<i64: 128, 128>}, {pipeline_mode = #tpu.pipeline_mode<synchronous>, transform_indices = @transform_4, window_bounds = array<i64: 1, 128>}, {pipeline_mode = #tpu.pipeline_mode<synchronous>, transform_indices = @transform_5, window_bounds = array<i64: 128, 128>}, {pipeline_mode = #tpu.pipeline_mode<synchronous>, transform_indices = @transform_6, window_bounds = array<i64: 1, 128>}, {pipeline_mode = #tpu.pipeline_mode<synchronous>, transform_indices = @transform_7, window_bounds = array<i64: 256, 128>}, {pipeline_mode = #tpu.pipeline_mode<synchronous>, transform_indices = @transform_8, window_bounds = array<i64: 8, 128>}, {pipeline_mode = #tpu.pipeline_mode<synchronous>, transform_indices = @transform_9, window_bounds = array<i64: 4, 128>}]} {
    %c0 = arith.constant 0 : index
    %c0_0 = arith.constant 0 : index
    %0 = vector.load %arg1[%c0, %c0_0] : memref<12x896xbf16, #tpu.memory_space<vmem>>, vector<12x896xbf16>
    %1 = arith.extf %0 : vector<12x896xbf16> to vector<12x896xf32>
    %2 = arith.mulf %1, %1 : vector<12x896xf32>
    %cst = arith.constant dense<0.000000e+00> : vector<12xf32>
    %3 = vector.multi_reduction <add>, %2, %cst [1] : vector<12x896xf32> to vector<12xf32>
    %4 = vector.shape_cast %3 : vector<12xf32> to vector<12x1xf32>
    %cst_1 = arith.constant 0.00127551018 : f32
    %5 = vector.broadcast %cst_1 : f32 to vector<12x1xf32>
    %6 = arith.mulf %4, %5 : vector<12x1xf32>
    %7 = math.sqrt %6 : vector<12x1xf32>
    %cst_2 = arith.constant 9.99999993E-9 : f32
    %8 = vector.broadcast %cst_2 : f32 to vector<12x1xf32>
    %9 = arith.addf %7, %8 : vector<12x1xf32>
    %10 = tpu.reciprocal %9 : vector<12x1xf32> -> vector<12x1xf32>
    %11 = vector.broadcast %10 : vector<12x1xf32> to vector<12x896xf32>
    %12 = arith.mulf %1, %11 : vector<12x896xf32>
    %13 = arith.truncf %12 : vector<12x896xf32> to vector<12x896xbf16>
    %cst_3 = arith.constant 0.000000e+00 : f32
    %14 = vector.broadcast %cst_3 : f32 to vector<4x128xf32>
    %c0_4 = arith.constant 0 : index
    %c0_5 = arith.constant 0 : index
    %15 = vector.load %arg2[%c0_4, %c0_5] : memref<896x128xbf16, #tpu.memory_space<vmem>>, vector<896x128xbf16>
    %cst_6 = arith.constant dense<0.000000e+00> : vector<12x128xf32>
    %16 = tpu.matmul %13, %15, %cst_6 {dimension_numbers = #tpu.dot_dimension_numbers<[1], [0], [0], [1], [0, 0, 1, 1], [], []>} : vector<12x896xbf16>, vector<896x128xbf16>, vector<12x128xf32> -> vector<12x128xf32>
    %c0_7 = arith.constant 0 : index
    %c0_8 = arith.constant 0 : index
    %17 = vector.load %arg3[%c0_7, %c0_8] : memref<1x128xf32, #tpu.memory_space<vmem>>, vector<1x128xf32>
    %18 = vector.broadcast %17 : vector<1x128xf32> to vector<12x128xf32>
    %19 = arith.addf %16, %18 : vector<12x128xf32>
    %cst_9 = arith.constant 0.000000e+00 : f32
    %20 = vector.broadcast %cst_9 : f32 to vector<12x128xf32>
    %21 = arith.maximumf %19, %20 : vector<12x128xf32>
    %22 = arith.mulf %21, %21 : vector<12x128xf32>
    %cst_10 = arith.constant dense<0.000000e+00> : vector<12xf32>
    %23 = vector.multi_reduction <add>, %22, %cst_10 [1] : vector<12x128xf32> to vector<12xf32>
    %24 = vector.shape_cast %23 : vector<12xf32> to vector<12x1xf32>
    %25 = vector.extract_strided_slice %24 {offsets = [0, 0], sizes = [8, 1], strides = [1, 1]} : vector<12x1xf32> to vector<8x1xf32>
    %cst_11 = arith.constant 7.812500e-03 : f32
    %26 = vector.broadcast %cst_11 : f32 to vector<12x1xf32>
    %27 = arith.mulf %24, %26 : vector<12x1xf32>
    %28 = math.sqrt %27 : vector<12x1xf32>
    %cst_12 = arith.constant 9.99999993E-9 : f32
    %29 = vector.broadcast %cst_12 : f32 to vector<12x1xf32>
    %30 = arith.addf %28, %29 : vector<12x1xf32>
    %31 = tpu.reciprocal %30 : vector<12x1xf32> -> vector<12x1xf32>
    %32 = vector.broadcast %31 : vector<12x1xf32> to vector<12x128xf32>
    %33 = arith.mulf %21, %32 : vector<12x128xf32>
    %34 = arith.truncf %33 : vector<12x128xf32> to vector<12x128xbf16>
    %c0_13 = arith.constant 0 : index
    %c0_14 = arith.constant 0 : index
    %35 = vector.load %arg4[%c0_13, %c0_14] : memref<128x128xbf16, #tpu.memory_space<vmem>>, vector<128x128xbf16>
    %cst_15 = arith.constant dense<0.000000e+00> : vector<12x128xf32>
    %36 = tpu.matmul %34, %35, %cst_15 {dimension_numbers = #tpu.dot_dimension_numbers<[1], [0], [0], [1], [0, 0, 1, 1], [], []>} : vector<12x128xbf16>, vector<128x128xbf16>, vector<12x128xf32> -> vector<12x128xf32>
    %c0_16 = arith.constant 0 : index
    %c0_17 = arith.constant 0 : index
    %37 = vector.load %arg5[%c0_16, %c0_17] : memref<1x128xf32, #tpu.memory_space<vmem>>, vector<1x128xf32>
    %38 = vector.broadcast %37 : vector<1x128xf32> to vector<12x128xf32>
    %39 = arith.addf %36, %38 : vector<12x128xf32>
    %cst_18 = arith.constant 0.000000e+00 : f32
    %40 = vector.broadcast %cst_18 : f32 to vector<12x128xf32>
    %41 = arith.maximumf %39, %40 : vector<12x128xf32>
    %42 = arith.mulf %41, %41 : vector<12x128xf32>
    %cst_19 = arith.constant dense<0.000000e+00> : vector<12xf32>
    %43 = vector.multi_reduction <add>, %42, %cst_19 [1] : vector<12x128xf32> to vector<12xf32>
    %44 = vector.shape_cast %43 : vector<12xf32> to vector<12x1xf32>
    %45 = vector.extract_strided_slice %44 {offsets = [0, 0], sizes = [8, 1], strides = [1, 1]} : vector<12x1xf32> to vector<8x1xf32>
    %cst_20 = arith.constant 7.812500e-03 : f32
    %46 = vector.broadcast %cst_20 : f32 to vector<12x1xf32>
    %47 = arith.mulf %44, %46 : vector<12x1xf32>
    %48 = math.sqrt %47 : vector<12x1xf32>
    %cst_21 = arith.constant 9.99999993E-9 : f32
    %49 = vector.broadcast %cst_21 : f32 to vector<12x1xf32>
    %50 = arith.addf %48, %49 : vector<12x1xf32>
    %51 = tpu.reciprocal %50 : vector<12x1xf32> -> vector<12x1xf32>
    %52 = vector.broadcast %51 : vector<12x1xf32> to vector<12x128xf32>
    %53 = arith.mulf %41, %52 : vector<12x128xf32>
    %54 = arith.truncf %53 : vector<12x128xf32> to vector<12x128xbf16>
    %55 = vector.extract_strided_slice %53 {offsets = [8, 0], sizes = [4, 128], strides = [1, 1]} : vector<12x128xf32> to vector<4x128xf32>
    %56 = arith.truncf %55 : vector<4x128xf32> to vector<4x128xbf16>
    %c0_22 = arith.constant 0 : index
    %c0_23 = arith.constant 0 : index
    %57 = vector.load %arg8[%c0_22, %c0_23] : memref<256x128xbf16, #tpu.memory_space<vmem>>, vector<128x128xbf16>
    %cst_24 = arith.constant dense<0.000000e+00> : vector<4x128xf32>
    %58 = tpu.matmul %56, %57, %cst_24 {dimension_numbers = #tpu.dot_dimension_numbers<[1], [0], [0], [1], [0, 0, 1, 1], [], []>} : vector<4x128xbf16>, vector<128x128xbf16>, vector<4x128xf32> -> vector<4x128xf32>
    %59 = arith.addf %14, %58 : vector<4x128xf32>
    %c0_25 = arith.constant 0 : index
    %c0_26 = arith.constant 0 : index
    %60 = vector.load %arg6[%c0_25, %c0_26] : memref<128x128xbf16, #tpu.memory_space<vmem>>, vector<128x128xbf16>
    %cst_27 = arith.constant dense<0.000000e+00> : vector<12x128xf32>
    %61 = tpu.matmul %54, %60, %cst_27 {dimension_numbers = #tpu.dot_dimension_numbers<[1], [0], [0], [1], [0, 0, 1, 1], [], []>} : vector<12x128xbf16>, vector<128x128xbf16>, vector<12x128xf32> -> vector<12x128xf32>
    %c0_28 = arith.constant 0 : index
    %c0_29 = arith.constant 0 : index
    %62 = vector.load %arg7[%c0_28, %c0_29] : memref<1x128xf32, #tpu.memory_space<vmem>>, vector<1x128xf32>
    %63 = vector.broadcast %62 : vector<1x128xf32> to vector<12x128xf32>
    %64 = arith.addf %61, %63 : vector<12x128xf32>
    %cst_30 = arith.constant 0.000000e+00 : f32
    %65 = vector.broadcast %cst_30 : f32 to vector<12x128xf32>
    %66 = arith.maximumf %64, %65 : vector<12x128xf32>
    %67 = arith.mulf %66, %66 : vector<12x128xf32>
    %cst_31 = arith.constant dense<0.000000e+00> : vector<12xf32>
    %68 = vector.multi_reduction <add>, %67, %cst_31 [1] : vector<12x128xf32> to vector<12xf32>
    %69 = vector.shape_cast %68 : vector<12xf32> to vector<12x1xf32>
    %70 = vector.extract_strided_slice %69 {offsets = [0, 0], sizes = [8, 1], strides = [1, 1]} : vector<12x1xf32> to vector<8x1xf32>
    %71 = vector.extract_strided_slice %69 {offsets = [8, 0], sizes = [4, 1], strides = [1, 1]} : vector<12x1xf32> to vector<4x1xf32>
    %cst_32 = arith.constant 7.812500e-03 : f32
    %72 = vector.broadcast %cst_32 : f32 to vector<4x1xf32>
    %73 = arith.mulf %71, %72 : vector<4x1xf32>
    %74 = math.sqrt %73 : vector<4x1xf32>
    %cst_33 = arith.constant 9.99999993E-9 : f32
    %75 = vector.broadcast %cst_33 : f32 to vector<4x1xf32>
    %76 = arith.addf %74, %75 : vector<4x1xf32>
    %77 = tpu.reciprocal %76 : vector<4x1xf32> -> vector<4x1xf32>
    %78 = vector.extract_strided_slice %66 {offsets = [8, 0], sizes = [4, 128], strides = [1, 1]} : vector<12x128xf32> to vector<4x128xf32>
    %79 = vector.broadcast %77 : vector<4x1xf32> to vector<4x128xf32>
    %80 = arith.mulf %78, %79 : vector<4x128xf32>
    %81 = arith.truncf %80 : vector<4x128xf32> to vector<4x128xbf16>
    %c128 = arith.constant 128 : index
    %c0_34 = arith.constant 0 : index
    %82 = vector.load %arg8[%c128, %c0_34] : memref<256x128xbf16, #tpu.memory_space<vmem>>, vector<128x128xbf16>
    %cst_35 = arith.constant dense<0.000000e+00> : vector<4x128xf32>
    %83 = tpu.matmul %81, %82, %cst_35 {dimension_numbers = #tpu.dot_dimension_numbers<[1], [0], [0], [1], [0, 0, 1, 1], [], []>} : vector<4x128xbf16>, vector<128x128xbf16>, vector<4x128xf32> -> vector<4x128xf32>
    %84 = arith.addf %59, %83 : vector<4x128xf32>
    %cst_36 = arith.constant 0.000000e+00 : f32
    %85 = vector.broadcast %cst_36 : f32 to vector<8x125xf32>
    %86 = tpu.concatenate %25, %45, %70, %85 in 1 : vector<8x1xf32>, vector<8x1xf32>, vector<8x1xf32>, vector<8x125xf32> -> vector<8x128xf32>
    %c0_37 = arith.constant 0 : index
    %c0_38 = arith.constant 0 : index
    %87 = vector.load %arg9[%c0_37, %c0_38] : memref<8x128xf32, #tpu.memory_space<vmem>>, vector<8x128xf32>
    tpu.vector_store %arg9[%c0_37, %c0_38], %86 {strides = array<i32>} : memref<8x128xf32, #tpu.memory_space<vmem>>, vector<8x128xf32>,
    %88 = vector.extract_strided_slice %84 {offsets = [0, 0], sizes = [4, 10], strides = [1, 1]} : vector<4x128xf32> to vector<4x10xf32>
    %cst_39 = arith.constant dense<0xFF800000> : vector<4xf32>
    %89 = vector.multi_reduction <maximumf>, %88, %cst_39 [1] : vector<4x10xf32> to vector<4xf32>
    %90 = vector.shape_cast %89 : vector<4xf32> to vector<4x1xf32>
    %91 = vector.broadcast %90 : vector<4x1xf32> to vector<4x128xf32>
    %92 = arith.subf %84, %91 : vector<4x128xf32>
    %c0_40 = arith.constant 0 : index
    %c0_41 = arith.constant 0 : index
    %93 = vector.load %arg10[%c0_40, %c0_41] : memref<4x128xf32, #tpu.memory_space<vmem>>, vector<4x128xf32>
    tpu.vector_store %arg10[%c0_40, %c0_41], %92 {strides = array<i32>} : memref<4x128xf32, #tpu.memory_space<vmem>>, vector<4x128xf32>,
    return
  }
  func.func @transform_0(%arg0: i32) -> (i32, i32) {
    %c0_i32 = arith.constant 0 : i32
    %c0_i32_0 = arith.constant 0 : i32
    %c0_i32_1 = arith.constant 0 : i32
    return %c0_i32, %c0_i32_0 : i32, i32
  }
  func.func @transform_1(%arg0: i32) -> (i32, i32) {
    %c0_i32 = arith.constant 0 : i32
    %c0_i32_0 = arith.constant 0 : i32
    %c0_i32_1 = arith.constant 0 : i32
    return %c0_i32, %c0_i32_0 : i32, i32
  }
  func.func @transform_2(%arg0: i32) -> (i32, i32) {
    %c0_i32 = arith.constant 0 : i32
    %c0_i32_0 = arith.constant 0 : i32
    %c0_i32_1 = arith.constant 0 : i32
    return %c0_i32, %c0_i32_0 : i32, i32
  }
  func.func @transform_3(%arg0: i32) -> (i32, i32) {
    %c0_i32 = arith.constant 0 : i32
    %c0_i32_0 = arith.constant 0 : i32
    %c0_i32_1 = arith.constant 0 : i32
    return %c0_i32, %c0_i32_0 : i32, i32
  }
  func.func @transform_4(%arg0: i32) -> (i32, i32) {
    %c0_i32 = arith.constant 0 : i32
    %c0_i32_0 = arith.constant 0 : i32
    %c0_i32_1 = arith.constant 0 : i32
    return %c0_i32, %c0_i32_0 : i32, i32
  }
  func.func @transform_5(%arg0: i32) -> (i32, i32) {
    %c0_i32 = arith.constant 0 : i32
    %c0_i32_0 = arith.constant 0 : i32
    %c0_i32_1 = arith.constant 0 : i32
    return %c0_i32, %c0_i32_0 : i32, i32
  }
  func.func @transform_6(%arg0: i32) -> (i32, i32) {
    %c0_i32 = arith.constant 0 : i32
    %c0_i32_0 = arith.constant 0 : i32
    %c0_i32_1 = arith.constant 0 : i32
    return %c0_i32, %c0_i32_0 : i32, i32
  }
  func.func @transform_7(%arg0: i32) -> (i32, i32) {
    %c0_i32 = arith.constant 0 : i32
    %c0_i32_0 = arith.constant 0 : i32
    %c0_i32_1 = arith.constant 0 : i32
    return %c0_i32, %c0_i32_0 : i32, i32
  }
  func.func @transform_8(%arg0: i32) -> (i32, i32) {
    %c0_i32 = arith.constant 0 : i32
    %c0_i32_0 = arith.constant 0 : i32
    %c0_i32_1 = arith.constant 0 : i32
    return %c0_i32, %c0_i32_0 : i32, i32
  }
  func.func @transform_9(%arg0: i32) -> (i32, i32) {
    %c0_i32 = arith.constant 0 : i32
    %c0_i32_0 = arith.constant 0 : i32
    %c0_i32_1 = arith.constant 0 : i32
    return %c0_i32, %c0_i32_0 : i32, i32
  }
}

</mosaic_0001>

<llo_original>
// kernel: ff_model_forward.1
$region0: #{ff_model_forward.1}
  #allocation0 [shape = 'u32[]', space=smem, size = 0x4, offset = 0x4, fixed_abs, tag = 'smem constant byte address 0x4 - core index']
  #allocation1 [shape = 'u32[144,128]{1,0:T(1,128)}', space=vmem, size = 0x12000, scoped, tag = 'internal scratch']
  %s0 = inlined_call_operand.vmem [shape: bf16[12,896], index: 0, kind: input, shape index: {}]
  %s1 = inlined_call_operand.vmem [shape: bf16[896,128], index: 1, kind: input, shape index: {}]
  %s2 = inlined_call_operand.vmem [shape: f32[1,128], index: 2, kind: input, shape index: {}]
  %s3 = inlined_call_operand.vmem [shape: bf16[128,128], index: 3, kind: input, shape index: {}]
  %s4 = inlined_call_operand.vmem [shape: f32[1,128], index: 4, kind: input, shape index: {}]
  %s5 = inlined_call_operand.vmem [shape: bf16[128,128], index: 5, kind: input, shape index: {}]
  %s6 = inlined_call_operand.vmem [shape: f32[1,128], index: 6, kind: input, shape index: {}]
  %s7 = inlined_call_operand.vmem [shape: bf16[256,128], index: 7, kind: input, shape index: {}]
  %s8 = inlined_call_operand.vmem [shape: f32[8,128], index: 8, kind: output, shape index: {0}]
  %s9 = inlined_call_operand.vmem [shape: f32[4,128], index: 9, kind: output, shape index: {1}]
  %10 = xla_tuple %s8, %s9
  %s11 = sld [smem:[#allocation0]]
  $region50: #{ff_model_forward.1} parent=0
    _
  %s13 = ssub.s32 1, %s11
  %s14 = scalar_select 0, %s13, %s11
  // Predicated region
  $region2: #{ff_model_forward.1} parent=0 // pred_check
    _
  $region3: #{ff_model_forward.1} parent=0 // pred_check_branch
    %16 = sbr.rel (0) target = $region5
  $region4: #{ff_model_forward.1} parent=0 // pred_region
    _
  $region5: #{ff_model_forward.1} parent=0 // pred_fallthru
    _
  // Predicated region
  $region6: #{ff_model_forward.1} parent=0 // pred_check
    _
  $region7: #{ff_model_forward.1} parent=0 // pred_check_branch
    %18 = sbr.rel (0) target = $region9
  $region8: #{ff_model_forward.1} parent=0 // pred_region
    _
  $region9: #{ff_model_forward.1} parent=0 // pred_fallthru
    _
  // Predicated region
  $region10: #{ff_model_forward.1} parent=0 // pred_check
    _
  $region11: #{ff_model_forward.1} parent=0 // pred_check_branch
    %20 = sbr.rel (0) target = $region13
  $region12: #{ff_model_forward.1} parent=0 // pred_region
    _
  $region13: #{ff_model_forward.1} parent=0 // pred_fallthru
    _
  // Predicated region
  $region14: #{ff_model_forward.1} parent=0 // pred_check
    _
  $region15: #{ff_model_forward.1} parent=0 // pred_check_branch
    %22 = sbr.rel (0) target = $region17
  $region16: #{ff_model_forward.1} parent=0 // pred_region
    _
  $region17: #{ff_model_forward.1} parent=0 // pred_fallthru
    _
  // Predicated region
  $region18: #{ff_model_forward.1} parent=0 // pred_check
    _
  $region19: #{ff_model_forward.1} parent=0 // pred_check_branch
    %24 = sbr.rel (0) target = $region21
  $region20: #{ff_model_forward.1} parent=0 // pred_region
    _
  $region21: #{ff_model_forward.1} parent=0 // pred_fallthru
    _
  // Predicated region
  $region22: #{ff_model_forward.1} parent=0 // pred_check
    _
  $region23: #{ff_model_forward.1} parent=0 // pred_check_branch
    %26 = sbr.rel (0) target = $region25
  $region24: #{ff_model_forward.1} parent=0 // pred_region
    _
  $region25: #{ff_model_forward.1} parent=0 // pred_fallthru
    _
  // Predicated region
  $region26: #{ff_model_forward.1} parent=0 // pred_check
    _
  $region27: #{ff_model_forward.1} parent=0 // pred_check_branch
    %28 = sbr.rel (0) target = $region29
  $region28: #{ff_model_forward.1} parent=0 // pred_region
    _
  $region29: #{ff_model_forward.1} parent=0 // pred_fallthru
    _
  // Predicated region
  $region30: #{ff_model_forward.1} parent=0 // pred_check
    _
  $region31: #{ff_model_forward.1} parent=0 // pred_check_branch
    %30 = sbr.rel (0) target = $region33
  $region32: #{ff_model_forward.1} parent=0 // pred_region
    _
  $region33: #{ff_model_forward.1} parent=0 // pred_fallthru
    _
  %v32 = vld [vmem:[%s0] sm:$0xff]
  %v33 = vld [vmem:[%s0 + $0x8] sm:$0xff]
  %v34 = vld [vmem:[%s0 + $0x10] sm:$0xff]
  %v35 = vld [vmem:[%s0 + $0x18] sm:$0xf]
  %v36 = vld [vmem:[%s0 + $0x1c] sm:$0x33]
  %v37 = vld [vmem:[%s0 + $0x24] sm:$0x33]
  %v38 = vld [vmem:[%s0 + $0x2c] sm:$0x33]
  %v39 = vld [vmem:[%s0 + $0x34] sm:$0x3]
  %v40 = vunpack.c.l.bf16 %v32
  %v41 = vunpack.c.h.bf16 %v32
  %v42 = vunpack.c.l.bf16 %v33
  %v43 = vunpack.c.h.bf16 %v33
  %v44 = vunpack.c.l.bf16 %v34
  %v45 = vunpack.c.h.bf16 %v34
  %v46 = vunpack.c.l.bf16 %v35
  %v47 = vunpack.c.l.bf16 %v36
  %v48 = vunpack.c.h.bf16 %v36
  %v49 = vunpack.c.l.bf16 %v37
  %v50 = vunpack.c.h.bf16 %v37
  %v51 = vunpack.c.l.bf16 %v38
  %v52 = vunpack.c.h.bf16 %v38
  %v53 = vunpack.c.l.bf16 %v39
  %v54 = vmul.f32 %v40, %v40
  %v55 = vmul.f32 %v41, %v41
  %v56 = vmul.f32 %v42, %v42
  %v57 = vmul.f32 %v43, %v43
  %v58 = vmul.f32 %v44, %v44
  %v59 = vmul.f32 %v45, %v45
  %v60 = vmul.f32 %v46, %v46
  %v61 = vmul.f32 %v47, %v47
  %v62 = vmul.f32 %v48, %v48
  %v63 = vmul.f32 %v49, %v49
  %v64 = vmul.f32 %v50, %v50
  %v65 = vmul.f32 %v51, %v51
  %v66 = vmul.f32 %v52, %v52
  %v67 = vmul.f32 %v53, %v53
  %v68 = vadd.f32 %v54, %v55
  %v69 = vadd.f32 %v68, %v56
  %v70 = vadd.f32 %v69, %v57
  %v71 = vadd.f32 %v70, %v58
  %v72 = vadd.f32 %v71, %v59
  %v73 = vadd.f32 %v72, %v60
  %74 = vadd.xlane.f32.xlu0 %v73
  %v75 = vpop.xlane.xlu0 %74
  %vm76 = vcmask 1043456
  %v77 = vsel %vm76, %v61, 0.0
  %v78 = vsel %vm76, %v62, 0.0
  %v79 = vadd.f32 %v77, %v78
  %v80 = vsel %vm76, %v63, 0.0
  %v81 = vadd.f32 %v79, %v80
  %v82 = vsel %vm76, %v64, 0.0
  %v83 = vadd.f32 %v81, %v82
  %v84 = vsel %vm76, %v65, 0.0
  %v85 = vadd.f32 %v83, %v84
  %v86 = vsel %vm76, %v66, 0.0
  %v87 = vadd.f32 %v85, %v86
  %v88 = vsel %vm76, %v67, 0.0
  %v89 = vadd.f32 %v87, %v88
  %90 = vadd.xlane.f32.xlu0 %v89
  %v91 = vpop.xlane.xlu0 %90
  %v92 = vmul.f32 %v75, 0.0012755102
  %v93 = vmul.f32 %v91, 0.0012755102
  %v94 = vrsqrt.pop %v92
  %v95 = vmul.f32 %v92, %v94
  %vm96 = vcmp.eq.f32.partialorder %v92, inf
  %v97 = vsel %vm96, %v92, %v95
  %vm98 = vcmp.eq.f32.partialorder %v92, 0.0
  %v99 = vand.u32 %v92, 2147483648
  %v100 = vsel %vm98, %v99, %v97
  %v101 = vrsqrt.pop %v93
  %v102 = vmul.f32 %v93, %v101
  %vm103 = vcmp.eq.f32.partialorder %v93, inf
  %v104 = vsel %vm103, %v93, %v102
  %vm105 = vcmp.eq.f32.partialorder %v93, 0.0
  %v106 = vand.u32 %v93, 2147483648
  %v107 = vsel %vm105, %v106, %v104
  %v108 = vadd.f32 %v100, 1e-08
  %v109 = vadd.f32 %v107, 1e-08
  %v110 = vrcp.pop %v108
  %v111 = vrcp.pop %v109
  %v112 = vmul.f32 %v40, %v110
  %v113 = vmul.f32 %v41, %v110
  %v114 = vmul.f32 %v42, %v110
  %v115 = vmul.f32 %v43, %v110
  %v116 = vmul.f32 %v44, %v110
  %v117 = vmul.f32 %v45, %v110
  %v118 = vmul.f32 %v46, %v110
  %v119 = vmul.f32 %v47, %v111
  %v120 = vmul.f32 %v48, %v111
  %v121 = vmul.f32 %v49, %v111
  %v122 = vmul.f32 %v50, %v111
  %v123 = vmul.f32 %v51, %v111
  %v124 = vmul.f32 %v52, %v111
  %v125 = vmul.f32 %v53, %v111
  %v126 = vpack.c.bf16 %v119, %v112
  %v127 = vpack.c.bf16 %v120, %v113
  %v128 = vpack.c.bf16 %v121, %v114
  %v129 = vpack.c.bf16 %v122, %v115
  %v130 = vpack.c.bf16 %v123, %v116
  %v131 = vpack.c.bf16 %v124, %v117
  %v132 = vpack.c.bf16 %v125, %v118
  %v133 = vld [vmem:[%s1] sm:$0xf]
  %v134 = vld [vmem:[%s1 + $0x4] sm:$0xf]
  %v135 = vld [vmem:[%s1 + $0x8] sm:$0xf]
  %v136 = vld [vmem:[%s1 + $0xc] sm:$0xf]
  %v137 = vld [vmem:[%s1 + $0x10] sm:$0xf]
  %v138 = vld [vmem:[%s1 + $0x14] sm:$0xf]
  %v139 = vld [vmem:[%s1 + $0x18] sm:$0xf]
  %v140 = vld [vmem:[%s1 + $0x1c] sm:$0xf]
  %v141 = vld [vmem:[%s1 + $0x20] sm:$0xf]
  %v142 = vld [vmem:[%s1 + $0x24] sm:$0xf]
  %v143 = vld [vmem:[%s1 + $0x28] sm:$0xf]
  %v144 = vld [vmem:[%s1 + $0x2c] sm:$0xf]
  %v145 = vld [vmem:[%s1 + $0x30] sm:$0xf]
  %v146 = vld [vmem:[%s1 + $0x34] sm:$0xf]
  %v147 = vld [vmem:[%s1 + $0x38] sm:$0xf]
  %v148 = vld [vmem:[%s1 + $0x3c] sm:$0xf]
  %v149 = vld [vmem:[%s1 + $0x40] sm:$0xf]
  %v150 = vld [vmem:[%s1 + $0x44] sm:$0xf]
  %v151 = vld [vmem:[%s1 + $0x48] sm:$0xf]
  %v152 = vld [vmem:[%s1 + $0x4c] sm:$0xf]
  %v153 = vld [vmem:[%s1 + $0x50] sm:$0xf]
  %v154 = vld [vmem:[%s1 + $0x54] sm:$0xf]
  %v155 = vld [vmem:[%s1 + $0x58] sm:$0xf]
  %v156 = vld [vmem:[%s1 + $0x5c] sm:$0xf]
  %v157 = vld [vmem:[%s1 + $0x60] sm:$0xf]
  %v158 = vld [vmem:[%s1 + $0x64] sm:$0xf]
  %v159 = vld [vmem:[%s1 + $0x68] sm:$0xf]
  %v160 = vld [vmem:[%s1 + $0x6c] sm:$0xf]
  %v161 = vld [vmem:[%s1 + $0x70] sm:$0xf]
  %v162 = vld [vmem:[%s1 + $0x74] sm:$0xf]
  %v163 = vld [vmem:[%s1 + $0x78] sm:$0xf]
  %v164 = vld [vmem:[%s1 + $0x7c] sm:$0xf]
  %v165 = vld [vmem:[%s1 + $0x80] sm:$0xf]
  %v166 = vld [vmem:[%s1 + $0x84] sm:$0xf]
  %v167 = vld [vmem:[%s1 + $0x88] sm:$0xf]
  %v168 = vld [vmem:[%s1 + $0x8c] sm:$0xf]
  %v169 = vld [vmem:[%s1 + $0x90] sm:$0xf]
  %v170 = vld [vmem:[%s1 + $0x94] sm:$0xf]
  %v171 = vld [vmem:[%s1 + $0x98] sm:$0xf]
  %v172 = vld [vmem:[%s1 + $0x9c] sm:$0xf]
  %v173 = vld [vmem:[%s1 + $0xa0] sm:$0xf]
  %v174 = vld [vmem:[%s1 + $0xa4] sm:$0xf]
  %v175 = vld [vmem:[%s1 + $0xa8] sm:$0xf]
  %v176 = vld [vmem:[%s1 + $0xac] sm:$0xf]
  %v177 = vld [vmem:[%s1 + $0xb0] sm:$0xf]
  %v178 = vld [vmem:[%s1 + $0xb4] sm:$0xf]
  %v179 = vld [vmem:[%s1 + $0xb8] sm:$0xf]
  %v180 = vld [vmem:[%s1 + $0xbc] sm:$0xf]
  %v181 = vld [vmem:[%s1 + $0xc0] sm:$0xf]
  %v182 = vld [vmem:[%s1 + $0xc4] sm:$0xf]
  %v183 = vld [vmem:[%s1 + $0xc8] sm:$0xf]
  %v184 = vld [vmem:[%s1 + $0xcc] sm:$0xf]
  %v185 = vld [vmem:[%s1 + $0xd0] sm:$0xf]
  %v186 = vld [vmem:[%s1 + $0xd4] sm:$0xf]
  %v187 = vld [vmem:[%s1 + $0xd8] sm:$0xf]
  %v188 = vld [vmem:[%s1 + $0xdc] sm:$0xf]
  %v189 = vld [vmem:[%s1 + $0xe0] sm:$0xf]
  %v190 = vld [vmem:[%s1 + $0xe4] sm:$0xf]
  %v191 = vld [vmem:[%s1 + $0xe8] sm:$0xf]
  %v192 = vld [vmem:[%s1 + $0xec] sm:$0xf]
  %v193 = vld [vmem:[%s1 + $0xf0] sm:$0xf]
  %v194 = vld [vmem:[%s1 + $0xf4] sm:$0xf]
  %v195 = vld [vmem:[%s1 + $0xf8] sm:$0xf]
  %v196 = vld [vmem:[%s1 + $0xfc] sm:$0xf]
  %v197 = vld [vmem:[%s1 + $0x100] sm:$0xf]
  %v198 = vld [vmem:[%s1 + $0x104] sm:$0xf]
  %v199 = vld [vmem:[%s1 + $0x108] sm:$0xf]
  %v200 = vld [vmem:[%s1 + $0x10c] sm:$0xf]
  %v201 = vld [vmem:[%s1 + $0x110] sm:$0xf]
  %v202 = vld [vmem:[%s1 + $0x114] sm:$0xf]
  %v203 = vld [vmem:[%s1 + $0x118] sm:$0xf]
  %v204 = vld [vmem:[%s1 + $0x11c] sm:$0xf]
  %v205 = vld [vmem:[%s1 + $0x120] sm:$0xf]
  %v206 = vld [vmem:[%s1 + $0x124] sm:$0xf]
  %v207 = vld [vmem:[%s1 + $0x128] sm:$0xf]
  %v208 = vld [vmem:[%s1 + $0x12c] sm:$0xf]
  %v209 = vld [vmem:[%s1 + $0x130] sm:$0xf]
  %v210 = vld [vmem:[%s1 + $0x134] sm:$0xf]
  %v211 = vld [vmem:[%s1 + $0x138] sm:$0xf]
  %v212 = vld [vmem:[%s1 + $0x13c] sm:$0xf]
  %v213 = vld [vmem:[%s1 + $0x140] sm:$0xf]
  %v214 = vld [vmem:[%s1 + $0x144] sm:$0xf]
  %v215 = vld [vmem:[%s1 + $0x148] sm:$0xf]
  %v216 = vld [vmem:[%s1 + $0x14c] sm:$0xf]
  %v217 = vld [vmem:[%s1 + $0x150] sm:$0xf]
  %v218 = vld [vmem:[%s1 + $0x154] sm:$0xf]
  %v219 = vld [vmem:[%s1 + $0x158] sm:$0xf]
  %v220 = vld [vmem:[%s1 + $0x15c] sm:$0xf]
  %v221 = vld [vmem:[%s1 + $0x160] sm:$0xf]
  %v222 = vld [vmem:[%s1 + $0x164] sm:$0xf]
  %v223 = vld [vmem:[%s1 + $0x168] sm:$0xf]
  %v224 = vld [vmem:[%s1 + $0x16c] sm:$0xf]
  %v225 = vld [vmem:[%s1 + $0x170] sm:$0xf]
  %v226 = vld [vmem:[%s1 + $0x174] sm:$0xf]
  %v227 = vld [vmem:[%s1 + $0x178] sm:$0xf]
  %v228 = vld [vmem:[%s1 + $0x17c] sm:$0xf]
  %v229 = vld [vmem:[%s1 + $0x180] sm:$0xf]
  %v230 = vld [vmem:[%s1 + $0x184] sm:$0xf]
  %v231 = vld [vmem:[%s1 + $0x188] sm:$0xf]
  %v232 = vld [vmem:[%s1 + $0x18c] sm:$0xf]
  %v233 = vld [vmem:[%s1 + $0x190] sm:$0xf]
  %v234 = vld [vmem:[%s1 + $0x194] sm:$0xf]
  %v235 = vld [vmem:[%s1 + $0x198] sm:$0xf]
  %v236 = vld [vmem:[%s1 + $0x19c] sm:$0xf]
  %v237 = vld [vmem:[%s1 + $0x1a0] sm:$0xf]
  %v238 = vld [vmem:[%s1 + $0x1a4] sm:$0xf]
  %v239 = vld [vmem:[%s1 + $0x1a8] sm:$0xf]
  %v240 = vld [vmem:[%s1 + $0x1ac] sm:$0xf]
  %v241 = vld [vmem:[%s1 + $0x1b0] sm:$0xf]
  %v242 = vld [vmem:[%s1 + $0x1b4] sm:$0xf]
  %v243 = vld [vmem:[%s1 + $0x1b8] sm:$0xf]
  %v244 = vld [vmem:[%s1 + $0x1bc] sm:$0xf]
  %v245 = vld [vmem:[%s2] sm:$0x1]
  %v247 = vlaneseq
  %v248 = vshrl.u32 %v247, 7
  %v249 = vsub.s32 0, %v248
  %v250 = vrot.slane %v245, %v249
  %v364 = vunpack.c.l.b16 %v133
  %v365 = vunpack.c.l.b16 %v134
  %v366 = vunpack.c.l.b16 %v135
  %v367 = vunpack.c.l.b16 %v136
  %v368 = vunpack.c.l.b16 %v137
  %v369 = vunpack.c.l.b16 %v138
  %v370 = vunpack.c.l.b16 %v139
  %v371 = vunpack.c.l.b16 %v140
  %v372 = vunpack.c.l.b16 %v141
  %v373 = vunpack.c.l.b16 %v142
  %v374 = vunpack.c.l.b16 %v143
  %v375 = vunpack.c.l.b16 %v144
  %v376 = vunpack.c.l.b16 %v145
  %v377 = vunpack.c.l.b16 %v146
  %v378 = vunpack.c.l.b16 %v147
  %v379 = vunpack.c.l.b16 %v148
  %v380 = vunpack.c.l.b16 %v149
  %v381 = vunpack.c.l.b16 %v150
  %v382 = vunpack.c.l.b16 %v151
  %v383 = vunpack.c.l.b16 %v152
  %v384 = vunpack.c.l.b16 %v153
  %v385 = vunpack.c.l.b16 %v154
  %v386 = vunpack.c.l.b16 %v155
  %v387 = vunpack.c.l.b16 %v156
  %v388 = vunpack.c.l.b16 %v157
  %v389 = vunpack.c.l.b16 %v158
  %v390 = vunpack.c.l.b16 %v159
  %v391 = vunpack.c.l.b16 %v160
  %v392 = vunpack.c.l.b16 %v161
  %v393 = vunpack.c.l.b16 %v162
  %v394 = vunpack.c.l.b16 %v163
  %v395 = vunpack.c.l.b16 %v164
  %v396 = vunpack.c.l.b16 %v165
  %v397 = vunpack.c.l.b16 %v166
  %v398 = vunpack.c.l.b16 %v167
  %v399 = vunpack.c.l.b16 %v168
  %v400 = vunpack.c.l.b16 %v169
  %v401 = vunpack.c.l.b16 %v170
  %v402 = vunpack.c.l.b16 %v171
  %v403 = vunpack.c.l.b16 %v172
  %v404 = vunpack.c.l.b16 %v173
  %v405 = vunpack.c.l.b16 %v174
  %v406 = vunpack.c.l.b16 %v175
  %v407 = vunpack.c.l.b16 %v176
  %v408 = vunpack.c.l.b16 %v177
  %v409 = vunpack.c.l.b16 %v178
  %v410 = vunpack.c.l.b16 %v179
  %v411 = vunpack.c.l.b16 %v180
  %v412 = vunpack.c.l.b16 %v181
  %v413 = vunpack.c.l.b16 %v182
  %v414 = vunpack.c.l.b16 %v183
  %v415 = vunpack.c.l.b16 %v184
  %v416 = vunpack.c.l.b16 %v185
  %v417 = vunpack.c.l.b16 %v186
  %v418 = vunpack.c.l.b16 %v187
  %v419 = vunpack.c.l.b16 %v188
  %v420 = vunpack.c.l.b16 %v189
  %v421 = vunpack.c.l.b16 %v190
  %v422 = vunpack.c.l.b16 %v191
  %v423 = vunpack.c.l.b16 %v192
  %v424 = vunpack.c.l.b16 %v193
  %v425 = vunpack.c.l.b16 %v194
  %v426 = vunpack.c.l.b16 %v195
  %v427 = vunpack.c.l.b16 %v196
  %v428 = vunpack.c.l.b16 %v197
  %v429 = vunpack.c.l.b16 %v198
  %v430 = vunpack.c.l.b16 %v199
  %v431 = vunpack.c.l.b16 %v200
  %v432 = vunpack.c.l.b16 %v201
  %v433 = vunpack.c.l.b16 %v202
  %v434 = vunpack.c.l.b16 %v203
  %v435 = vunpack.c.l.b16 %v204
  %v436 = vunpack.c.l.b16 %v205
  %v437 = vunpack.c.l.b16 %v206
  %v438 = vunpack.c.l.b16 %v207
  %v439 = vunpack.c.l.b16 %v208
  %v440 = vunpack.c.l.b16 %v209
  %v441 = vunpack.c.l.b16 %v210
  %v442 = vunpack.c.l.b16 %v211
  %v443 = vunpack.c.l.b16 %v212
  %v444 = vunpack.c.l.b16 %v213
  %v445 = vunpack.c.l.b16 %v214
  %v446 = vunpack.c.l.b16 %v215
  %v447 = vunpack.c.l.b16 %v216
  %v448 = vunpack.c.l.b16 %v217
  %v449 = vunpack.c.l.b16 %v218
  %v450 = vunpack.c.l.b16 %v219
  %v451 = vunpack.c.l.b16 %v220
  %v452 = vunpack.c.l.b16 %v221
  %v453 = vunpack.c.l.b16 %v222
  %v454 = vunpack.c.l.b16 %v223
  %v455 = vunpack.c.l.b16 %v224
  %v456 = vunpack.c.l.b16 %v225
  %v457 = vunpack.c.l.b16 %v226
  %v458 = vunpack.c.l.b16 %v227
  %v459 = vunpack.c.l.b16 %v228
  %v460 = vunpack.c.l.b16 %v229
  %v461 = vunpack.c.l.b16 %v230
  %v462 = vunpack.c.l.b16 %v231
  %v463 = vunpack.c.l.b16 %v232
  %v464 = vunpack.c.l.b16 %v233
  %v465 = vunpack.c.l.b16 %v234
  %v466 = vunpack.c.l.b16 %v235
  %v467 = vunpack.c.l.b16 %v236
  %v468 = vunpack.c.l.b16 %v237
  %v469 = vunpack.c.l.b16 %v238
  %v470 = vunpack.c.l.b16 %v239
  %v471 = vunpack.c.l.b16 %v240
  %v472 = vunpack.c.l.b16 %v241
  %v473 = vunpack.c.l.b16 %v242
  %v474 = vunpack.c.l.b16 %v243
  %v475 = vunpack.c.l.b16 %v244
  %v476 = vpack.c.b16 %v365, %v364
  %v477 = vpack.c.b16 %v367, %v366
  %v478 = vpack.c.b16 %v369, %v368
  %v479 = vpack.c.b16 %v371, %v370
  %v480 = vpack.c.b16 %v373, %v372
  %v481 = vpack.c.b16 %v375, %v374
  %v482 = vpack.c.b16 %v377, %v376
  %v483 = vpack.c.b16 %v379, %v378
  %v484 = vpack.c.b16 %v381, %v380
  %v485 = vpack.c.b16 %v383, %v382
  %v486 = vpack.c.b16 %v385, %v384
  %v487 = vpack.c.b16 %v387, %v386
  %v488 = vpack.c.b16 %v389, %v388
  %v489 = vpack.c.b16 %v391, %v390
  %v490 = vpack.c.b16 %v393, %v392
  %v491 = vpack.c.b16 %v395, %v394
  %v492 = vpack.c.b16 %v397, %v396
  %v493 = vpack.c.b16 %v399, %v398
  %v494 = vpack.c.b16 %v401, %v400
  %v495 = vpack.c.b16 %v403, %v402
  %v496 = vpack.c.b16 %v405, %v404
  %v497 = vpack.c.b16 %v407, %v406
  %v498 = vpack.c.b16 %v409, %v408
  %v499 = vpack.c.b16 %v411, %v410
  %v500 = vpack.c.b16 %v413, %v412
  %v501 = vpack.c.b16 %v415, %v414
  %v502 = vpack.c.b16 %v417, %v416
  %v503 = vpack.c.b16 %v419, %v418
  %v504 = vpack.c.b16 %v421, %v420
  %v505 = vpack.c.b16 %v423, %v422
  %v506 = vpack.c.b16 %v425, %v424
  %v507 = vpack.c.b16 %v427, %v426
  %v508 = vpack.c.b16 %v429, %v428
  %v509 = vpack.c.b16 %v431, %v430
  %v510 = vpack.c.b16 %v433, %v432
  %v511 = vpack.c.b16 %v435, %v434
  %v512 = vpack.c.b16 %v437, %v436
  %v513 = vpack.c.b16 %v439, %v438
  %v514 = vpack.c.b16 %v441, %v440
  %v515 = vpack.c.b16 %v443, %v442
  %v516 = vpack.c.b16 %v445, %v444
  %v517 = vpack.c.b16 %v447, %v446
  %v518 = vpack.c.b16 %v449, %v448
  %v519 = vpack.c.b16 %v451, %v450
  %v520 = vpack.c.b16 %v453, %v452
  %v521 = vpack.c.b16 %v455, %v454
  %v522 = vpack.c.b16 %v457, %v456
  %v523 = vpack.c.b16 %v459, %v458
  %v524 = vpack.c.b16 %v461, %v460
  %v525 = vpack.c.b16 %v463, %v462
  %v526 = vpack.c.b16 %v465, %v464
  %v527 = vpack.c.b16 %v467, %v466
  %v528 = vpack.c.b16 %v469, %v468
  %v529 = vpack.c.b16 %v471, %v470
  %v530 = vpack.c.b16 %v473, %v472
  %v531 = vpack.c.b16 %v475, %v474
  %588 = vmatprep.subr.bf16.mxu0 0
  %589 = vmatpush1.bf16.msra.mxu0 %v476
  %590 = vmatprep.subr.bf16.mxu0 0
  %591 = vmatpush1.bf16.msra.mxu0 %v477
  %592 = vmatprep.subr.bf16.mxu0 0
  %593 = vmatpush1.bf16.msra.mxu0 %v478
  %594 = vmatprep.subr.bf16.mxu0 0
  %595 = vmatpush1.bf16.msra.mxu0 %v479
  %596 = vmatprep.subr.bf16.mxu0 0
  %597 = vmatpush1.bf16.msra.mxu0 %v480
  %598 = vmatprep.subr.bf16.mxu0 0
  %599 = vmatpush1.bf16.msra.mxu0 %v481
  %600 = vmatprep.subr.bf16.mxu0 0
  %601 = vmatpush1.bf16.msra.mxu0 %v482
  %602 = vmatprep.subr.bf16.mxu0 0
  %603 = vmatpush1.bf16.msra.mxu0 %v483
  %604 = vmatprep.subr.bf16.mxu0 0
  %605 = vmatpush1.bf16.msra.mxu0 %v484
  %606 = vmatprep.subr.bf16.mxu0 0
  %607 = vmatpush1.bf16.msra.mxu0 %v485
  %608 = vmatprep.subr.bf16.mxu0 0
  %609 = vmatpush1.bf16.msra.mxu0 %v486
  %610 = vmatprep.subr.bf16.mxu0 0
  %611 = vmatpush1.bf16.msra.mxu0 %v487
  %612 = vmatprep.subr.bf16.mxu0 0
  %613 = vmatpush1.bf16.msra.mxu0 %v488
  %614 = vmatprep.subr.bf16.mxu0 0
  %615 = vmatpush1.bf16.msra.mxu0 %v489
  %616 = vmatprep.subr.bf16.mxu0 0
  %617 = vmatpush1.bf16.msra.mxu0 %v490
  %618 = vmatprep.subr.bf16.mxu0 0
  %619 = vmatpush1.bf16.msra.mxu0 %v491
  %620 = vmatprep.mubr.bf16.mxu0 %v127
  %621 = vmatmul.mubr.bf16.gmra.mrb[0].mxu0 %v126
  %v622 = vpop.f32.mrb[0].mxu0
  %v623 = vadd.f32 %v250, %v622
  %v624 = vpop.f32.mrb[0].mxu0
  %v625 = vpop.f32.mrb[0].mxu0
  %v626 = vadd.f32 %v250, %v625
  %v627 = vpop.f32.mrb[0].mxu0
  %628 = vdwg.mxu0
  %629 = vmatprep.subr.bf16.mxu0 0
  %630 = vmatpush1.bf16.msra.mxu0 %v492
  %631 = vmatprep.subr.bf16.mxu0 0
  %632 = vmatpush1.bf16.msra.mxu0 %v493
  %633 = vmatprep.subr.bf16.mxu0 0
  %634 = vmatpush1.bf16.msra.mxu0 %v494
  %635 = vmatprep.subr.bf16.mxu0 0
  %636 = vmatpush1.bf16.msra.mxu0 %v495
  %637 = vmatprep.subr.bf16.mxu0 0
  %638 = vmatpush1.bf16.msra.mxu0 %v496
  %639 = vmatprep.subr.bf16.mxu0 0
  %640 = vmatpush1.bf16.msra.mxu0 %v497
  %641 = vmatprep.subr.bf16.mxu0 0
  %642 = vmatpush1.bf16.msra.mxu0 %v498
  %643 = vmatprep.subr.bf16.mxu0 0
  %644 = vmatpush1.bf16.msra.mxu0 %v499
  %645 = vmatprep.subr.bf16.mxu0 0
  %646 = vmatpush1.bf16.msra.mxu0 %v500
  %647 = vmatprep.subr.bf16.mxu0 0
  %648 = vmatpush1.bf16.msra.mxu0 %v501
  %649 = vmatprep.subr.bf16.mxu0 0
  %650 = vmatpush1.bf16.msra.mxu0 %v502
  %651 = vmatprep.subr.bf16.mxu0 0
  %652 = vmatpush1.bf16.msra.mxu0 %v503
  %653 = vmatprep.subr.bf16.mxu0 0
  %654 = vmatpush1.bf16.msra.mxu0 %v504
  %655 = vmatprep.subr.bf16.mxu0 0
  %656 = vmatpush1.bf16.msra.mxu0 %v505
  %657 = vmatprep.subr.bf16.mxu0 0
  %658 = vmatpush1.bf16.msra.mxu0 %v506
  %659 = vmatprep.subr.bf16.mxu0 0
  %660 = vmatpush1.bf16.msra.mxu0 %v507
  %661 = vmatprep.mubr.bf16.mxu0 %v129
  %662 = vmatmul.mubr.bf16.gmra.mrb[0].mxu0 %v128
  %v663 = vpop.f32.mrb[0].mxu0
  %v664 = vadd.f32 %v623, %v663
  %v665 = vpop.f32.mrb[0].mxu0
  %v666 = vpop.f32.mrb[0].mxu0
  %v667 = vadd.f32 %v626, %v666
  %v668 = vpop.f32.mrb[0].mxu0
  %669 = vdwg.mxu0
  %670 = vmatprep.subr.bf16.mxu0 0
  %671 = vmatpush1.bf16.msra.mxu0 %v508
  %672 = vmatprep.subr.bf16.mxu0 0
  %673 = vmatpush1.bf16.msra.mxu0 %v509
  %674 = vmatprep.subr.bf16.mxu0 0
  %675 = vmatpush1.bf16.msra.mxu0 %v510
  %676 = vmatprep.subr.bf16.mxu0 0
  %677 = vmatpush1.bf16.msra.mxu0 %v511
  %678 = vmatprep.subr.bf16.mxu0 0
  %679 = vmatpush1.bf16.msra.mxu0 %v512
  %680 = vmatprep.subr.bf16.mxu0 0
  %681 = vmatpush1.bf16.msra.mxu0 %v513
  %682 = vmatprep.subr.bf16.mxu0 0
  %683 = vmatpush1.bf16.msra.mxu0 %v514
  %684 = vmatprep.subr.bf16.mxu0 0
  %685 = vmatpush1.bf16.msra.mxu0 %v515
  %686 = vmatprep.subr.bf16.mxu0 0
  %687 = vmatpush1.bf16.msra.mxu0 %v516
  %688 = vmatprep.subr.bf16.mxu0 0
  %689 = vmatpush1.bf16.msra.mxu0 %v517
  %690 = vmatprep.subr.bf16.mxu0 0
  %691 = vmatpush1.bf16.msra.mxu0 %v518
  %692 = vmatprep.subr.bf16.mxu0 0
  %693 = vmatpush1.bf16.msra.mxu0 %v519
  %694 = vmatprep.subr.bf16.mxu0 0
  %695 = vmatpush1.bf16.msra.mxu0 %v520
  %696 = vmatprep.subr.bf16.mxu0 0
  %697 = vmatpush1.bf16.msra.mxu0 %v521
  %698 = vmatprep.subr.bf16.mxu0 0
  %699 = vmatpush1.bf16.msra.mxu0 %v522
  %700 = vmatprep.subr.bf16.mxu0 0
  %701 = vmatpush1.bf16.msra.mxu0 %v523
  %702 = vmatprep.mubr.bf16.mxu0 %v131
  %703 = vmatmul.mubr.bf16.gmra.mrb[0].mxu0 %v130
  %v704 = vpop.f32.mrb[0].mxu0
  %v705 = vadd.f32 %v664, %v704
  %v706 = vpop.f32.mrb[0].mxu0
  %v707 = vpop.f32.mrb[0].mxu0
  %v708 = vadd.f32 %v667, %v707
  %v709 = vpop.f32.mrb[0].mxu0
  %710 = vdwg.mxu0
  %711 = vmatprep.subr.bf16.mxu0 0
  %712 = vmatpush1.bf16.msra.mxu0 %v524
  %713 = vmatprep.subr.bf16.mxu0 0
  %714 = vmatpush1.bf16.msra.mxu0 %v525
  %715 = vmatprep.subr.bf16.mxu0 0
  %716 = vmatpush1.bf16.msra.mxu0 %v526
  %717 = vmatprep.subr.bf16.mxu0 0
  %718 = vmatpush1.bf16.msra.mxu0 %v527
  %719 = vmatprep.subr.bf16.mxu0 0
  %720 = vmatpush1.bf16.msra.mxu0 %v528
  %721 = vmatprep.subr.bf16.mxu0 0
  %722 = vmatpush1.bf16.msra.mxu0 %v529
  %723 = vmatprep.subr.bf16.mxu0 0
  %724 = vmatpush1.bf16.msra.mxu0 %v530
  %725 = vmatprep.subr.bf16.mxu0 0
  %726 = vmatpush1.bf16.msra.mxu0 %v531
  %727 = vmatprep.subr.bf16.mxu0 0
  %728 = vmatpush1.bf16.msra.mxu0 0
  %729 = vmatprep.subr.bf16.mxu0 0
  %730 = vmatpush1.bf16.msra.mxu0 0
  %731 = vmatprep.subr.bf16.mxu0 0
  %732 = vmatpush1.bf16.msra.mxu0 0
  %733 = vmatprep.subr.bf16.mxu0 0
  %734 = vmatpush1.bf16.msra.mxu0 0
  %735 = vmatprep.subr.bf16.mxu0 0
  %736 = vmatpush1.bf16.msra.mxu0 0
  %737 = vmatprep.subr.bf16.mxu0 0
  %738 = vmatpush1.bf16.msra.mxu0 0
  %739 = vmatprep.subr.bf16.mxu0 0
  %740 = vmatpush1.bf16.msra.mxu0 0
  %741 = vmatprep.subr.bf16.mxu0 0
  %742 = vmatpush1.bf16.msra.mxu0 0
  %743 = vmatprep.mubr.bf16.mxu0 0
  %744 = vmatmul.mubr.bf16.gmra.mrb[0].mxu0 %v132
  %v745 = vpop.f32.mrb[0].mxu0
  %v746 = vadd.f32 %v705, %v745
  %v747 = vpop.f32.mrb[0].mxu0
  %v748 = vpop.f32.mrb[0].mxu0
  %v749 = vadd.f32 %v708, %v748
  %v750 = vpop.f32.mrb[0].mxu0
  %751 = vdwg.mxu0
  %v752 = vmax.f32 %v746, 0.0
  %v753 = vmax.f32 %v749, 0.0
  %v754 = vmul.f32 %v752, %v752
  %v755 = vmul.f32 %v753, %v753
  %756 = vadd.xlane.f32.xlu0 %v754
  %v757 = vpop.xlane.xlu0 %756
  %v758 = vsel %vm76, %v755, 0.0
  %759 = vadd.xlane.f32.xlu0 %v758
  %v760 = vpop.xlane.xlu0 %759
  %v761 = vmul.f32 %v757, 0.0078125
  %v762 = vmul.f32 %v760, 0.0078125
  %v763 = vrsqrt.pop %v761
  %v764 = vmul.f32 %v761, %v763
  %vm765 = vcmp.eq.f32.partialorder %v761, inf
  %v766 = vsel %vm765, %v761, %v764
  %vm767 = vcmp.eq.f32.partialorder %v761, 0.0
  %v768 = vand.u32 %v761, 2147483648
  %v769 = vsel %vm767, %v768, %v766
  %v770 = vrsqrt.pop %v762
  %v771 = vmul.f32 %v762, %v770
  %vm772 = vcmp.eq.f32.partialorder %v762, inf
  %v773 = vsel %vm772, %v762, %v771
  %vm774 = vcmp.eq.f32.partialorder %v762, 0.0
  %v775 = vand.u32 %v762, 2147483648
  %v776 = vsel %vm774, %v775, %v773
  %v777 = vadd.f32 %v769, 1e-08
  %v778 = vadd.f32 %v776, 1e-08
  %v779 = vrcp.pop %v777
  %v780 = vrcp.pop %v778
  %v781 = vmul.f32 %v752, %v779
  %v782 = vmul.f32 %v753, %v780
  %v783 = vpack.c.bf16 %v782, %v781
  %v784 = vld [vmem:[%s3] sm:$0xf]
  %v785 = vld [vmem:[%s3 + $0x4] sm:$0xf]
  %v786 = vld [vmem:[%s3 + $0x8] sm:$0xf]
  %v787 = vld [vmem:[%s3 + $0xc] sm:$0xf]
  %v788 = vld [vmem:[%s3 + $0x10] sm:$0xf]
  %v789 = vld [vmem:[%s3 + $0x14] sm:$0xf]
  %v790 = vld [vmem:[%s3 + $0x18] sm:$0xf]
  %v791 = vld [vmem:[%s3 + $0x1c] sm:$0xf]
  %v792 = vld [vmem:[%s3 + $0x20] sm:$0xf]
  %v793 = vld [vmem:[%s3 + $0x24] sm:$0xf]
  %v794 = vld [vmem:[%s3 + $0x28] sm:$0xf]
  %v795 = vld [vmem:[%s3 + $0x2c] sm:$0xf]
  %v796 = vld [vmem:[%s3 + $0x30] sm:$0xf]
  %v797 = vld [vmem:[%s3 + $0x34] sm:$0xf]
  %v798 = vld [vmem:[%s3 + $0x38] sm:$0xf]
  %v799 = vld [vmem:[%s3 + $0x3c] sm:$0xf]
  %v800 = vld [vmem:[%s4] sm:$0x1]
  %v802 = vlaneseq
  %v803 = vshrl.u32 %v802, 7
  %v804 = vsub.s32 0, %v803
  %v805 = vrot.slane %v800, %v804
  %v823 = vunpack.c.l.b16 %v784
  %v824 = vunpack.c.l.b16 %v785
  %v825 = vunpack.c.l.b16 %v786
  %v826 = vunpack.c.l.b16 %v787
  %v827 = vunpack.c.l.b16 %v788
  %v828 = vunpack.c.l.b16 %v789
  %v829 = vunpack.c.l.b16 %v790
  %v830 = vunpack.c.l.b16 %v791
  %v831 = vunpack.c.l.b16 %v792
  %v832 = vunpack.c.l.b16 %v793
  %v833 = vunpack.c.l.b16 %v794
  %v834 = vunpack.c.l.b16 %v795
  %v835 = vunpack.c.l.b16 %v796
  %v836 = vunpack.c.l.b16 %v797
  %v837 = vunpack.c.l.b16 %v798
  %v838 = vunpack.c.l.b16 %v799
  %v839 = vpack.c.b16 %v824, %v823
  %v840 = vpack.c.b16 %v826, %v825
  %v841 = vpack.c.b16 %v828, %v827
  %v842 = vpack.c.b16 %v830, %v829
  %v843 = vpack.c.b16 %v832, %v831
  %v844 = vpack.c.b16 %v834, %v833
  %v845 = vpack.c.b16 %v836, %v835
  %v846 = vpack.c.b16 %v838, %v837
  %855 = vmatprep.subr.bf16.mxu0 0
  %856 = vmatpush1.bf16.msra.mxu0 %v839
  %857 = vmatprep.subr.bf16.mxu0 0
  %858 = vmatpush1.bf16.msra.mxu0 %v840
  %859 = vmatprep.subr.bf16.mxu0 0
  %860 = vmatpush1.bf16.msra.mxu0 %v841
  %861 = vmatprep.subr.bf16.mxu0 0
  %862 = vmatpush1.bf16.msra.mxu0 %v842
  %863 = vmatprep.subr.bf16.mxu0 0
  %864 = vmatpush1.bf16.msra.mxu0 %v843
  %865 = vmatprep.subr.bf16.mxu0 0
  %866 = vmatpush1.bf16.msra.mxu0 %v844
  %867 = vmatprep.subr.bf16.mxu0 0
  %868 = vmatpush1.bf16.msra.mxu0 %v845
  %869 = vmatprep.subr.bf16.mxu0 0
  %870 = vmatpush1.bf16.msra.mxu0 %v846
  %871 = vmatprep.subr.bf16.mxu0 0
  %872 = vmatpush1.bf16.msra.mxu0 0
  %873 = vmatprep.subr.bf16.mxu0 0
  %874 = vmatpush1.bf16.msra.mxu0 0
  %875 = vmatprep.subr.bf16.mxu0 0
  %876 = vmatpush1.bf16.msra.mxu0 0
  %877 = vmatprep.subr.bf16.mxu0 0
  %878 = vmatpush1.bf16.msra.mxu0 0
  %879 = vmatprep.subr.bf16.mxu0 0
  %880 = vmatpush1.bf16.msra.mxu0 0
  %881 = vmatprep.subr.bf16.mxu0 0
  %882 = vmatpush1.bf16.msra.mxu0 0
  %883 = vmatprep.subr.bf16.mxu0 0
  %884 = vmatpush1.bf16.msra.mxu0 0
  %885 = vmatprep.subr.bf16.mxu0 0
  %886 = vmatpush1.bf16.msra.mxu0 0
  %887 = vmatprep.mubr.bf16.mxu0 0
  %888 = vmatmul.mubr.bf16.gmra.mrb[0].mxu0 %v783
  %v889 = vpop.f32.mrb[0].mxu0
  %v890 = vadd.f32 %v805, %v889
  %v891 = vpop.f32.mrb[0].mxu0
  %v892 = vpop.f32.mrb[0].mxu0
  %v893 = vadd.f32 %v805, %v892
  %v894 = vpop.f32.mrb[0].mxu0
  %895 = vdwg.mxu0
  %v896 = vmax.f32 %v890, 0.0
  %v897 = vmax.f32 %v893, 0.0
  %v898 = vmul.f32 %v896, %v896
  %v899 = vmul.f32 %v897, %v897
  %900 = vadd.xlane.f32.xlu0 %v898
  %v901 = vpop.xlane.xlu0 %900
  %v902 = vsel %vm76, %v899, 0.0
  %903 = vadd.xlane.f32.xlu0 %v902
  %v904 = vpop.xlane.xlu0 %903
  %v905 = vmul.f32 %v901, 0.0078125
  %v906 = vmul.f32 %v904, 0.0078125
  %v907 = vrsqrt.pop %v905
  %v908 = vmul.f32 %v905, %v907
  %vm909 = vcmp.eq.f32.partialorder %v905, inf
  %v910 = vsel %vm909, %v905, %v908
  %vm911 = vcmp.eq.f32.partialorder %v905, 0.0
  %v912 = vand.u32 %v905, 2147483648
  %v913 = vsel %vm911, %v912, %v910
  %v914 = vrsqrt.pop %v906
  %v915 = vmul.f32 %v906, %v914
  %vm916 = vcmp.eq.f32.partialorder %v906, inf
  %v917 = vsel %vm916, %v906, %v915
  %vm918 = vcmp.eq.f32.partialorder %v906, 0.0
  %v919 = vand.u32 %v906, 2147483648
  %v920 = vsel %vm918, %v919, %v917
  %v921 = vadd.f32 %v913, 1e-08
  %v922 = vadd.f32 %v920, 1e-08
  %v923 = vrcp.pop %v921
  %v924 = vrcp.pop %v922
  %v925 = vmul.f32 %v896, %v923
  %v926 = vmul.f32 %v897, %v924
  %v927 = vpack.c.bf16 %v926, %v925
  %v928 = vpack.c.bf16 %v926, %v926
  %v929 = vld [vmem:[%s7] sm:$0xf]
  %v930 = vld [vmem:[%s7 + $0x4] sm:$0xf]
  %v931 = vld [vmem:[%s7 + $0x8] sm:$0xf]
  %v932 = vld [vmem:[%s7 + $0xc] sm:$0xf]
  %v933 = vld [vmem:[%s7 + $0x10] sm:$0xf]
  %v934 = vld [vmem:[%s7 + $0x14] sm:$0xf]
  %v935 = vld [vmem:[%s7 + $0x18] sm:$0xf]
  %v936 = vld [vmem:[%s7 + $0x1c] sm:$0xf]
  %v937 = vld [vmem:[%s7 + $0x20] sm:$0xf]
  %v938 = vld [vmem:[%s7 + $0x24] sm:$0xf]
  %v939 = vld [vmem:[%s7 + $0x28] sm:$0xf]
  %v940 = vld [vmem:[%s7 + $0x2c] sm:$0xf]
  %v941 = vld [vmem:[%s7 + $0x30] sm:$0xf]
  %v942 = vld [vmem:[%s7 + $0x34] sm:$0xf]
  %v943 = vld [vmem:[%s7 + $0x38] sm:$0xf]
  %v944 = vld [vmem:[%s7 + $0x3c] sm:$0xf]
  %v945 = vld [vmem:[%s5] sm:$0xf]
  %v946 = vld [vmem:[%s5 + $0x4] sm:$0xf]
  %v947 = vld [vmem:[%s5 + $0x8] sm:$0xf]
  %v948 = vld [vmem:[%s5 + $0xc] sm:$0xf]
  %v949 = vld [vmem:[%s5 + $0x10] sm:$0xf]
  %v950 = vld [vmem:[%s5 + $0x14] sm:$0xf]
  %v951 = vld [vmem:[%s5 + $0x18] sm:$0xf]
  %v952 = vld [vmem:[%s5 + $0x1c] sm:$0xf]
  %v953 = vld [vmem:[%s5 + $0x20] sm:$0xf]
  %v954 = vld [vmem:[%s5 + $0x24] sm:$0xf]
  %v955 = vld [vmem:[%s5 + $0x28] sm:$0xf]
  %v956 = vld [vmem:[%s5 + $0x2c] sm:$0xf]
  %v957 = vld [vmem:[%s5 + $0x30] sm:$0xf]
  %v958 = vld [vmem:[%s5 + $0x34] sm:$0xf]
  %v959 = vld [vmem:[%s5 + $0x38] sm:$0xf]
  %v960 = vld [vmem:[%s5 + $0x3c] sm:$0xf]
  %v961 = vld [vmem:[%s6] sm:$0x1]
  %v963 = vlaneseq
  %v964 = vshrl.u32 %v963, 7
  %v965 = vsub.s32 0, %v964
  %v966 = vrot.slane %v961, %v965
  %v984 = vunpack.c.l.b16 %v945
  %v985 = vunpack.c.l.b16 %v946
  %v986 = vunpack.c.l.b16 %v947
  %v987 = vunpack.c.l.b16 %v948
  %v988 = vunpack.c.l.b16 %v949
  %v989 = vunpack.c.l.b16 %v950
  %v990 = vunpack.c.l.b16 %v951
  %v991 = vunpack.c.l.b16 %v952
  %v992 = vunpack.c.l.b16 %v953
  %v993 = vunpack.c.l.b16 %v954
  %v994 = vunpack.c.l.b16 %v955
  %v995 = vunpack.c.l.b16 %v956
  %v996 = vunpack.c.l.b16 %v957
  %v997 = vunpack.c.l.b16 %v958
  %v998 = vunpack.c.l.b16 %v959
  %v999 = vunpack.c.l.b16 %v960
  %v1000 = vpack.c.b16 %v985, %v984
  %v1001 = vpack.c.b16 %v987, %v986
  %v1002 = vpack.c.b16 %v989, %v988
  %v1003 = vpack.c.b16 %v991, %v990
  %v1004 = vpack.c.b16 %v993, %v992
  %v1005 = vpack.c.b16 %v995, %v994
  %v1006 = vpack.c.b16 %v997, %v996
  %v1007 = vpack.c.b16 %v999, %v998
  %1016 = vmatprep.subr.bf16.mxu0 0
  %1017 = vmatpush1.bf16.msra.mxu0 %v1000
  %1018 = vmatprep.subr.bf16.mxu0 0
  %1019 = vmatpush1.bf16.msra.mxu0 %v1001
  %1020 = vmatprep.subr.bf16.mxu0 0
  %1021 = vmatpush1.bf16.msra.mxu0 %v1002
  %1022 = vmatprep.subr.bf16.mxu0 0
  %1023 = vmatpush1.bf16.msra.mxu0 %v1003
  %1024 = vmatprep.subr.bf16.mxu0 0
  %1025 = vmatpush1.bf16.msra.mxu0 %v1004
  %1026 = vmatprep.subr.bf16.mxu0 0
  %1027 = vmatpush1.bf16.msra.mxu0 %v1005
  %1028 = vmatprep.subr.bf16.mxu0 0
  %1029 = vmatpush1.bf16.msra.mxu0 %v1006
  %1030 = vmatprep.subr.bf16.mxu0 0
  %1031 = vmatpush1.bf16.msra.mxu0 %v1007
  %1032 = vmatprep.subr.bf16.mxu0 0
  %1033 = vmatpush1.bf16.msra.mxu0 0
  %1034 = vmatprep.subr.bf16.mxu0 0
  %1035 = vmatpush1.bf16.msra.mxu0 0
  %1036 = vmatprep.subr.bf16.mxu0 0
  %1037 = vmatpush1.bf16.msra.mxu0 0
  %1038 = vmatprep.subr.bf16.mxu0 0
  %1039 = vmatpush1.bf16.msra.mxu0 0
  %1040 = vmatprep.subr.bf16.mxu0 0
  %1041 = vmatpush1.bf16.msra.mxu0 0
  %1042 = vmatprep.subr.bf16.mxu0 0
  %1043 = vmatpush1.bf16.msra.mxu0 0
  %1044 = vmatprep.subr.bf16.mxu0 0
  %1045 = vmatpush1.bf16.msra.mxu0 0
  %1046 = vmatprep.subr.bf16.mxu0 0
  %1047 = vmatpush1.bf16.msra.mxu0 0
  %1048 = vmatprep.mubr.bf16.mxu0 0
  %1049 = vmatmul.mubr.bf16.gmra.mrb[0].mxu0 %v927
  %v1050 = vpop.f32.mrb[0].mxu0
  %v1051 = vadd.f32 %v966, %v1050
  %v1052 = vpop.f32.mrb[0].mxu0
  %v1053 = vpop.f32.mrb[0].mxu0
  %v1054 = vadd.f32 %v966, %v1053
  %v1055 = vpop.f32.mrb[0].mxu0
  %1056 = vdwg.mxu0
  %v1057 = vmax.f32 %v1051, 0.0
  %v1058 = vmax.f32 %v1054, 0.0
  %v1059 = vmul.f32 %v1057, %v1057
  %v1060 = vmul.f32 %v1058, %v1058
  %1061 = vadd.xlane.f32.xlu0 %v1059
  %v1062 = vpop.xlane.xlu0 %1061
  %v1063 = vsel %vm76, %v1060, 0.0
  %1064 = vadd.xlane.f32.xlu0 %v1063
  %v1065 = vpop.xlane.xlu0 %1064
  %v1066 = vmul.f32 %v1065, 0.0078125
  %v1067 = vrsqrt.pop %v1066
  %v1068 = vmul.f32 %v1066, %v1067
  %vm1069 = vcmp.eq.f32.partialorder %v1066, inf
  %v1070 = vsel %vm1069, %v1066, %v1068
  %vm1071 = vcmp.eq.f32.partialorder %v1066, 0.0
  %v1072 = vand.u32 %v1066, 2147483648
  %v1073 = vsel %vm1071, %v1072, %v1070
  %v1074 = vadd.f32 %v1073, 1e-08
  %v1075 = vrcp.pop %v1074
  %v1076 = vmul.f32 %v1058, %v1075
  %v1077 = vpack.c.bf16 %v1076, %v1076
  %v1078 = vld [vmem:[%s7 + $0x40] sm:$0xf]
  %v1079 = vld [vmem:[%s7 + $0x44] sm:$0xf]
  %v1080 = vld [vmem:[%s7 + $0x48] sm:$0xf]
  %v1081 = vld [vmem:[%s7 + $0x4c] sm:$0xf]
  %v1082 = vld [vmem:[%s7 + $0x50] sm:$0xf]
  %v1083 = vld [vmem:[%s7 + $0x54] sm:$0xf]
  %v1084 = vld [vmem:[%s7 + $0x58] sm:$0xf]
  %v1085 = vld [vmem:[%s7 + $0x5c] sm:$0xf]
  %v1086 = vld [vmem:[%s7 + $0x60] sm:$0xf]
  %v1087 = vld [vmem:[%s7 + $0x64] sm:$0xf]
  %v1088 = vld [vmem:[%s7 + $0x68] sm:$0xf]
  %v1089 = vld [vmem:[%s7 + $0x6c] sm:$0xf]
  %v1090 = vld [vmem:[%s7 + $0x70] sm:$0xf]
  %v1091 = vld [vmem:[%s7 + $0x74] sm:$0xf]
  %v1092 = vld [vmem:[%s7 + $0x78] sm:$0xf]
  %v1093 = vld [vmem:[%s7 + $0x7c] sm:$0xf]
  %v1110 = vunpack.c.l.b16 %v1078
  %v1111 = vunpack.c.l.b16 %v1079
  %v1112 = vunpack.c.l.b16 %v1080
  %v1113 = vunpack.c.l.b16 %v1081
  %v1114 = vunpack.c.l.b16 %v1082
  %v1115 = vunpack.c.l.b16 %v1083
  %v1116 = vunpack.c.l.b16 %v1084
  %v1117 = vunpack.c.l.b16 %v1085
  %v1118 = vunpack.c.l.b16 %v1086
  %v1119 = vunpack.c.l.b16 %v1087
  %v1120 = vunpack.c.l.b16 %v1088
  %v1121 = vunpack.c.l.b16 %v1089
  %v1122 = vunpack.c.l.b16 %v1090
  %v1123 = vunpack.c.l.b16 %v1091
  %v1124 = vunpack.c.l.b16 %v1092
  %v1125 = vunpack.c.l.b16 %v1093
  %v1126 = vpack.c.b16 %v1111, %v1110
  %v1127 = vpack.c.b16 %v1113, %v1112
  %v1128 = vpack.c.b16 %v1115, %v1114
  %v1129 = vpack.c.b16 %v1117, %v1116
  %v1130 = vpack.c.b16 %v1119, %v1118
  %v1131 = vpack.c.b16 %v1121, %v1120
  %v1132 = vpack.c.b16 %v1123, %v1122
  %v1133 = vpack.c.b16 %v1125, %v1124
  %1142 = vmatprep.subr.bf16.mxu0 0
  %1143 = vmatpush1.bf16.msra.mxu0 %v1126
  %1144 = vmatprep.subr.bf16.mxu0 0
  %1145 = vmatpush1.bf16.msra.mxu0 %v1127
  %1146 = vmatprep.subr.bf16.mxu0 0
  %1147 = vmatpush1.bf16.msra.mxu0 %v1128
  %1148 = vmatprep.subr.bf16.mxu0 0
  %1149 = vmatpush1.bf16.msra.mxu0 %v1129
  %1150 = vmatprep.subr.bf16.mxu0 0
  %1151 = vmatpush1.bf16.msra.mxu0 %v1130
  %1152 = vmatprep.subr.bf16.mxu0 0
  %1153 = vmatpush1.bf16.msra.mxu0 %v1131
  %1154 = vmatprep.subr.bf16.mxu0 0
  %1155 = vmatpush1.bf16.msra.mxu0 %v1132
  %1156 = vmatprep.subr.bf16.mxu0 0
  %1157 = vmatpush1.bf16.msra.mxu0 %v1133
  %1158 = vmatprep.subr.bf16.mxu0 0
  %1159 = vmatpush1.bf16.msra.mxu0 0
  %1160 = vmatprep.subr.bf16.mxu0 0
  %1161 = vmatpush1.bf16.msra.mxu0 0
  %1162 = vmatprep.subr.bf16.mxu0 0
  %1163 = vmatpush1.bf16.msra.mxu0 0
  %1164 = vmatprep.subr.bf16.mxu0 0
  %1165 = vmatpush1.bf16.msra.mxu0 0
  %1166 = vmatprep.subr.bf16.mxu0 0
  %1167 = vmatpush1.bf16.msra.mxu0 0
  %1168 = vmatprep.subr.bf16.mxu0 0
  %1169 = vmatpush1.bf16.msra.mxu0 0
  %1170 = vmatprep.subr.bf16.mxu0 0
  %1171 = vmatpush1.bf16.msra.mxu0 0
  %1172 = vmatprep.subr.bf16.mxu0 0
  %1173 = vmatpush1.bf16.msra.mxu0 0
  %1174 = vmatprep.mubr.bf16.mxu0 0
  %1175 = vmatmul.mubr.bf16.gmra.mrb[0].mxu0 %v1077
  %v1176 = vpop.f32.mrb[0].mxu0
  %v1177 = vadd.f32 0.0, %v1176
  %v1178 = vpop.f32.mrb[0].mxu0
  %v1179 = vpop.f32.mrb[0].mxu0
  %v1180 = vpop.f32.mrb[0].mxu0
  %1181 = vdwg.mxu0
  %v1198 = vunpack.c.l.b16 %v929
  %v1199 = vunpack.c.l.b16 %v930
  %v1200 = vunpack.c.l.b16 %v931
  %v1201 = vunpack.c.l.b16 %v932
  %v1202 = vunpack.c.l.b16 %v933
  %v1203 = vunpack.c.l.b16 %v934
  %v1204 = vunpack.c.l.b16 %v935
  %v1205 = vunpack.c.l.b16 %v936
  %v1206 = vunpack.c.l.b16 %v937
  %v1207 = vunpack.c.l.b16 %v938
  %v1208 = vunpack.c.l.b16 %v939
  %v1209 = vunpack.c.l.b16 %v940
  %v1210 = vunpack.c.l.b16 %v941
  %v1211 = vunpack.c.l.b16 %v942
  %v1212 = vunpack.c.l.b16 %v943
  %v1213 = vunpack.c.l.b16 %v944
  %v1214 = vpack.c.b16 %v1199, %v1198
  %v1215 = vpack.c.b16 %v1201, %v1200
  %v1216 = vpack.c.b16 %v1203, %v1202
  %v1217 = vpack.c.b16 %v1205, %v1204
  %v1218 = vpack.c.b16 %v1207, %v1206
  %v1219 = vpack.c.b16 %v1209, %v1208
  %v1220 = vpack.c.b16 %v1211, %v1210
  %v1221 = vpack.c.b16 %v1213, %v1212
  %1230 = vmatprep.subr.bf16.mxu0 0
  %1231 = vmatpush1.bf16.msra.mxu0 %v1214
  %1232 = vmatprep.subr.bf16.mxu0 0
  %1233 = vmatpush1.bf16.msra.mxu0 %v1215
  %1234 = vmatprep.subr.bf16.mxu0 0
  %1235 = vmatpush1.bf16.msra.mxu0 %v1216
  %1236 = vmatprep.subr.bf16.mxu0 0
  %1237 = vmatpush1.bf16.msra.mxu0 %v1217
  %1238 = vmatprep.subr.bf16.mxu0 0
  %1239 = vmatpush1.bf16.msra.mxu0 %v1218
  %1240 = vmatprep.subr.bf16.mxu0 0
  %1241 = vmatpush1.bf16.msra.mxu0 %v1219
  %1242 = vmatprep.subr.bf16.mxu0 0
  %1243 = vmatpush1.bf16.msra.mxu0 %v1220
  %1244 = vmatprep.subr.bf16.mxu0 0
  %1245 = vmatpush1.bf16.msra.mxu0 %v1221
  %1246 = vmatprep.subr.bf16.mxu0 0
  %1247 = vmatpush1.bf16.msra.mxu0 0
  %1248 = vmatprep.subr.bf16.mxu0 0
  %1249 = vmatpush1.bf16.msra.mxu0 0
  %1250 = vmatprep.subr.bf16.mxu0 0
  %1251 = vmatpush1.bf16.msra.mxu0 0
  %1252 = vmatprep.subr.bf16.mxu0 0
  %1253 = vmatpush1.bf16.msra.mxu0 0
  %1254 = vmatprep.subr.bf16.mxu0 0
  %1255 = vmatpush1.bf16.msra.mxu0 0
  %1256 = vmatprep.subr.bf16.mxu0 0
  %1257 = vmatpush1.bf16.msra.mxu0 0
  %1258 = vmatprep.subr.bf16.mxu0 0
  %1259 = vmatpush1.bf16.msra.mxu0 0
  %1260 = vmatprep.subr.bf16.mxu0 0
  %1261 = vmatpush1.bf16.msra.mxu0 0
  %1262 = vmatprep.mubr.bf16.mxu0 0
  %1263 = vmatmul.mubr.bf16.gmra.mrb[0].mxu0 %v928
  %v1264 = vpop.f32.mrb[0].mxu0
  %v1265 = vadd.f32 %v1177, %v1264
  %v1266 = vpop.f32.mrb[0].mxu0
  %v1267 = vpop.f32.mrb[0].mxu0
  %v1268 = vpop.f32.mrb[0].mxu0
  %1269 = vdwg.mxu0
  %vm1270 = vcmask 7168
  %v1271 = vsel %vm1270, %v757, %v901
  %vm1272 = vcmask 15360
  %v1273 = vsel %vm1272, %v1271, %v1062
  %vm1274 = vcmask 23552
  %v1275 = vsel %vm1274, %v1273, 0.0
  %1276 = vst [vmem:[%s8] sm:$0xff] %v1275
  %vm1277 = vcmask 76800
  %v1278 = vsel %vm1277, %v1265, -inf
  %1279 = vmax.xlane.f32.xlu0 %v1278
  %v1280 = vpop.xlane.xlu0 %1279
  %v1281 = vsub.f32 %v1265, %v1280
  %1282 = vst [vmem:[%s9] sm:$0xf] %v1281
  // Predicated region
  $region34: #{ff_model_forward.1} parent=0 // pred_check
    _
  $region35: #{ff_model_forward.1} parent=0 // pred_check_branch
    %1284 = sbr.rel (0) target = $region37
  $region36: #{ff_model_forward.1} parent=0 // pred_region
    _
  $region37: #{ff_model_forward.1} parent=0 // pred_fallthru
    _
  // Predicated region
  $region38: #{ff_model_forward.1} parent=0 // pred_check
    _
  $region39: #{ff_model_forward.1} parent=0 // pred_check_branch
    %1286 = sbr.rel (0) target = $region41
  $region40: #{ff_model_forward.1} parent=0 // pred_region
    _
  $region41: #{ff_model_forward.1} parent=0 // pred_fallthru
    _
  // Predicated region
  $region42: #{ff_model_forward.1} parent=0 // pred_check
    _
  $region43: #{ff_model_forward.1} parent=0 // pred_check_branch
    %1288 = sbr.rel (0) target = $region45
  $region44: #{ff_model_forward.1} parent=0 // pred_region
    _
  $region45: #{ff_model_forward.1} parent=0 // pred_fallthru
    _
  // Predicated region
  $region46: #{ff_model_forward.1} parent=0 // pred_check
    _
  $region47: #{ff_model_forward.1} parent=0 // pred_check_branch
    %1290 = sbr.rel (0) target = $region49
  $region48: #{ff_model_forward.1} parent=0 // pred_region
    _
  $region49: #{ff_model_forward.1} parent=0 // pred_fallthru
    _

</llo_original>
